<compile_context>
chip_gen: v5e
topology: v5e:2x2
jax: 0.10.0
libtpu: 0.0.40
codegen_flags: <defaults>
</compile_context>

<pallas_src>
import functools
import math

import numpy as np
import jax
import jax.numpy as jnp
from jax.experimental import pallas as pl
from jax.experimental.pallas import tpu as pltpu

LANE = 128


def _round_up(n, m):
    return ((n + m - 1) // m) * m


def _cdiv(a, b):
    return (a + b - 1) // b


def _vmem_capacity_bytes():
    try:
        return int(pltpu.get_tpu_info().vmem_capacity_bytes)
    except Exception:
        return 128 * 1024 * 1024  # v5e / v6e physical VMEM


def _mlp_kernel(x_ref, *refs, num_layers, compute_dtype):
    """Fused [Linear -> ReLU]*n -> Linear on one (block_rows, .) row tile."""
    out_ref = refs[-1]
    param_refs = refs[:-1]

    h = x_ref[...]                                    # (rows, in_size), compute dtype
    for i in range(num_layers):                       # static unroll over layers
        w = param_refs[2 * i][...]                    # (in_i, out_i), pre-transposed
        b = param_refs[2 * i + 1][...]                # (1, out_i), f32
        # Canonical (M,K)x(K,N): the MXU consumes w directly, no in-kernel transpose.
        acc = jnp.dot(h.astype(compute_dtype), w,
                      preferred_element_type=jnp.float32)
        h = acc + b                                   # f32 bias add (VPU)
        if i < num_layers - 1:
            h = jnp.maximum(h, 0.0)                   # ReLU (VPU, f32)
    out_ref[...] = h.astype(out_ref.dtype)


def mlp_forward(x, weights, biases, *, compute_dtype=jnp.bfloat16,
                max_block_rows=None, pad_output_lanes=True):
    """x: (B, in_size); weights[i]: (out_i, in_i) PyTorch layout; biases[i]: (out_i,)."""
    B, in_size = x.shape
    num_layers = len(weights)
    out_size = weights[-1].shape[0]
    out_dtype = x.dtype

    # --- generation-aware VMEM budget --------------------------------------
    vmem_cap = _vmem_capacity_bytes()                 # 64 MiB (v7x) / 128 MiB (v5e, v6e)
    vmem_limit = int(min(vmem_cap * 3 // 4, 96 * 1024 * 1024))
    if max_block_rows is None:
        max_block_rows = 256 if vmem_cap <= 64 * 1024 * 1024 else 512

    # --- one-time parameter prep (do at parameter-prep time in real usage) --
    out_padded = _round_up(out_size, LANE) if pad_output_lanes else out_size
    params = []
    for li, (w, b) in enumerate(zip(weights, biases)):
        w_t = w.T                                     # (in_i, out_i): native (K, N) MXU feed
        b2 = b.reshape(1, -1).astype(jnp.float32)
        if li == num_layers - 1 and out_padded != out_size:
            w_t = jnp.pad(w_t, ((0, 0), (0, out_padded - out_size)))
            b2 = jnp.pad(b2, ((0, 0), (0, out_padded - out_size)))
        params += [w_t.astype(compute_dtype), b2]
    x_in = x.astype(compute_dtype)

    # --- block-row sizing against the VMEM budget ---------------------------
    act_bytes = int(np.dtype(compute_dtype).itemsize)
    row_align = max(8, 32 // act_bytes)               # 16 for bf16, 8 for f32
    layer_widths = [w.shape[0] for w in weights[:-1]] + [out_padded]
    max_width = max([in_size] + layer_widths)
    per_row = (2 * act_bytes * in_size                # double-buffered x block
               + 2 * 4 * out_padded                   # double-buffered f32 out block
               + 3 * 4 * max_width)                   # live f32 intermediates (generous)
    weight_bytes = sum(int(p.size) * p.dtype.itemsize for p in params)  # single-buffered
    budget = vmem_limit - weight_bytes - (4 << 20)    # slack for DMA bookkeeping
    if budget <= 0:
        # TODO(synk): stream weight tiles (K-tiled grid axis + f32 accumulator,
        # or pltpu.emit_pipeline) instead of holding every weight resident.
        raise ValueError("MLP weights do not fit in the VMEM budget; "
                         "weight streaming is not implemented.")
    rows_cap = max(budget // per_row, 1)

    block_rows = min(max_block_rows, int(rows_cap), _round_up(B, row_align))
    block_rows = max(row_align, (block_rows // row_align) * row_align)
    # v7x has two TensorCores: give the "parallel" batch axis >= 2 steps when a
    # single step would carry enough work for the split to beat ~0.35us/step.
    if _cdiv(B, block_rows) == 1 and B >= 256:
        block_rows = _round_up(_cdiv(B, 2), row_align)

    Bp = _round_up(B, block_rows)
    if Bp != B:
        x_in = jnp.pad(x_in, ((0, Bp - B), (0, 0)))
    grid = (Bp // block_rows,)

    # --- specs & call --------------------------------------------------------
    def run(single_buffer_weights):
        in_specs = [pl.BlockSpec((block_rows, in_size), lambda i: (i, 0))]
        extra = ({"pipeline_mode": pl.Buffered(buffer_count=1)}
                 if single_buffer_weights else {})
        for p in params:
            # Grid-invariant full-array block: fetched once, single-buffered
            # when supported.
            in_specs.append(pl.BlockSpec(p.shape, lambda i: (0, 0), **extra))

        return pl.pallas_call(
            functools.partial(_mlp_kernel, num_layers=num_layers,
                              compute_dtype=compute_dtype),
            out_shape=jax.ShapeDtypeStruct((Bp, out_padded), out_dtype),
            grid_spec=pltpu.PrefetchScalarGridSpec(
                num_scalar_prefetch=0,
                grid=grid,
                in_specs=in_specs,
                out_specs=pl.BlockSpec((block_rows, out_padded), lambda i: (i, 0)),
            ),
            compiler_params=pltpu.CompilerParams(
                dimension_semantics=("parallel",),
                vmem_limit_bytes=vmem_limit),
        )(x_in, *params)

    try:
        out = run(True)
    except Exception:
        # JAX without BlockSpec pipeline_mode support: identical math, default
        # double-buffered weight specs.
        out = run(False)

    return out[:B, :out_size]


def _reference(x, weights, biases):
    """Pure-JAX reference mirroring the PyTorch forward exactly."""
    h = x
    n = len(weights)
    for i, (w, b) in enumerate(zip(weights, biases)):
        h = h @ w.T + b
        if i < n - 1:
            h = jnp.maximum(h, 0.0)
    return h


if __name__ == "__main__":
    # Config: in_size=32, hidden_dims=[64, 32], out_size=16, batch=8
    B, in_size, hidden_dims, out_size = 8, 32, [64, 32], 16
    dims = [in_size] + hidden_dims + [out_size]

    root = jax.random.PRNGKey(0)
    kx, *layer_keys = jax.random.split(root, 1 + 2 * (len(dims) - 1))

    x = jax.random.normal(kx, (B, in_size), dtype=jnp.float32)

    # Deterministic PyTorch-style Linear init: uniform(-1/sqrt(fan_in), 1/sqrt(fan_in)).
    weights, biases = [], []
    for li in range(len(dims) - 1):
        fan_in, fan_out = dims[li], dims[li + 1]
        bound = 1.0 / math.sqrt(fan_in)
        kw, kb = layer_keys[2 * li], layer_keys[2 * li + 1]
        weights.append(jax.random.uniform(kw, (fan_out, fan_in), jnp.float32, -bound, bound))
        biases.append(jax.random.uniform(kb, (fan_out,), jnp.float32, -bound, bound))

    ref = _reference(x, weights, biases)

    # 1) Exact f32 path: validates kernel structure (transposed-weight dot,
    #    lane padding, row padding) with tight tolerance.
    out_f32 = jax.block_until_ready(
        mlp_forward(x, weights, biases, compute_dtype=jnp.float32))
    assert out_f32.shape == (B, out_size)
    assert jnp.allclose(out_f32, ref, atol=1e-4, rtol=1e-4), "f32 path mismatch"

    # 2) Default path: bf16 MXU feed with f32 accumulation (v5e/v6e/v7x-native).
    out_bf16 = jax.block_until_ready(mlp_forward(x, weights, biases))
    assert out_bf16.shape == (B, out_size)
    assert jnp.allclose(out_bf16, ref, atol=5e-2, rtol=5e-2), "bf16 path mismatch"

    print("KERNEL_OK")
</pallas_src>

<mosaic_0001>
module attributes {stable_mosaic.version = 11 : i64} {
  func.func @_mlp_kernel(%arg0: i32, %arg1: memref<8x32xf32, #tpu.memory_space<vmem>>, %arg2: memref<32x64xf32, #tpu.memory_space<vmem>>, %arg3: memref<1x64xf32, #tpu.memory_space<vmem>>, %arg4: memref<64x32xf32, #tpu.memory_space<vmem>>, %arg5: memref<1x32xf32, #tpu.memory_space<vmem>>, %arg6: memref<32x128xf32, #tpu.memory_space<vmem>>, %arg7: memref<1x128xf32, #tpu.memory_space<vmem>>, %arg8: memref<8x128xf32, #tpu.memory_space<vmem>>) attributes {dimension_semantics = [#tpu.dimension_semantics<parallel>], iteration_bounds = array<i64: 1>, scalar_prefetch = 0 : i64, scratch_operands = 0 : i64, tpu.core_type = #tpu.core_type<tc>, window_params = [{transform_indices = @transform_0, window_bounds = array<i64: 8, 32>}, {pipeline_mode = #tpu.pipeline_mode<synchronous>, transform_indices = @transform_1, window_bounds = array<i64: 32, 64>}, {pipeline_mode = #tpu.pipeline_mode<synchronous>, transform_indices = @transform_2, window_bounds = array<i64: 1, 64>}, {pipeline_mode = #tpu.pipeline_mode<synchronous>, transform_indices = @transform_3, window_bounds = array<i64: 64, 32>}, {pipeline_mode = #tpu.pipeline_mode<synchronous>, transform_indices = @transform_4, window_bounds = array<i64: 1, 32>}, {pipeline_mode = #tpu.pipeline_mode<synchronous>, transform_indices = @transform_5, window_bounds = array<i64: 32, 128>}, {pipeline_mode = #tpu.pipeline_mode<synchronous>, transform_indices = @transform_6, window_bounds = array<i64: 1, 128>}, {transform_indices = @transform_7, window_bounds = array<i64: 8, 128>}]} {
    %c0 = arith.constant 0 : index
    %c0_0 = arith.constant 0 : index
    %0 = vector.load %arg1[%c0, %c0_0] : memref<8x32xf32, #tpu.memory_space<vmem>>, vector<8x32xf32>
    %c0_1 = arith.constant 0 : index
    %c0_2 = arith.constant 0 : index
    %1 = vector.load %arg2[%c0_1, %c0_2] : memref<32x64xf32, #tpu.memory_space<vmem>>, vector<32x64xf32>
    %c0_3 = arith.constant 0 : index
    %c0_4 = arith.constant 0 : index
    %2 = vector.load %arg3[%c0_3, %c0_4] : memref<1x64xf32, #tpu.memory_space<vmem>>, vector<1x64xf32>
    %cst = arith.constant dense<0.000000e+00> : vector<8x64xf32>
    %3 = tpu.matmul %0, %1, %cst {dimension_numbers = #tpu.dot_dimension_numbers<[1], [0], [0], [1], [0, 0, 1, 1], [], []>} : vector<8x32xf32>, vector<32x64xf32>, vector<8x64xf32> -> vector<8x64xf32>
    %4 = vector.broadcast %2 : vector<1x64xf32> to vector<8x64xf32>
    %5 = arith.addf %3, %4 : vector<8x64xf32>
    %cst_5 = arith.constant 0.000000e+00 : f32
    %6 = vector.broadcast %cst_5 : f32 to vector<8x64xf32>
    %7 = arith.maximumf %5, %6 : vector<8x64xf32>
    %c0_6 = arith.constant 0 : index
    %c0_7 = arith.constant 0 : index
    %8 = vector.load %arg4[%c0_6, %c0_7] : memref<64x32xf32, #tpu.memory_space<vmem>>, vector<64x32xf32>
    %c0_8 = arith.constant 0 : index
    %c0_9 = arith.constant 0 : index
    %9 = vector.load %arg5[%c0_8, %c0_9] : memref<1x32xf32, #tpu.memory_space<vmem>>, vector<1x32xf32>
    %cst_10 = arith.constant dense<0.000000e+00> : vector<8x32xf32>
    %10 = tpu.matmul %7, %8, %cst_10 {dimension_numbers = #tpu.dot_dimension_numbers<[1], [0], [0], [1], [0, 0, 1, 1], [], []>} : vector<8x64xf32>, vector<64x32xf32>, vector<8x32xf32> -> vector<8x32xf32>
    %11 = vector.broadcast %9 : vector<1x32xf32> to vector<8x32xf32>
    %12 = arith.addf %10, %11 : vector<8x32xf32>
    %cst_11 = arith.constant 0.000000e+00 : f32
    %13 = vector.broadcast %cst_11 : f32 to vector<8x32xf32>
    %14 = arith.maximumf %12, %13 : vector<8x32xf32>
    %c0_12 = arith.constant 0 : index
    %c0_13 = arith.constant 0 : index
    %15 = vector.load %arg6[%c0_12, %c0_13] : memref<32x128xf32, #tpu.memory_space<vmem>>, vector<32x128xf32>
    %c0_14 = arith.constant 0 : index
    %c0_15 = arith.constant 0 : index
    %16 = vector.load %arg7[%c0_14, %c0_15] : memref<1x128xf32, #tpu.memory_space<vmem>>, vector<1x128xf32>
    %cst_16 = arith.constant dense<0.000000e+00> : vector<8x128xf32>
    %17 = tpu.matmul %14, %15, %cst_16 {dimension_numbers = #tpu.dot_dimension_numbers<[1], [0], [0], [1], [0, 0, 1, 1], [], []>} : vector<8x32xf32>, vector<32x128xf32>, vector<8x128xf32> -> vector<8x128xf32>
    %18 = vector.broadcast %16 : vector<1x128xf32> to vector<8x128xf32>
    %19 = arith.addf %17, %18 : vector<8x128xf32>
    %c0_17 = arith.constant 0 : index
    %c0_18 = arith.constant 0 : index
    %20 = vector.load %arg8[%c0_17, %c0_18] : memref<8x128xf32, #tpu.memory_space<vmem>>, vector<8x128xf32>
    tpu.vector_store %arg8[%c0_17, %c0_18], %19 {strides = array<i32>} : memref<8x128xf32, #tpu.memory_space<vmem>>, vector<8x128xf32>,
    return
  }
  func.func @transform_0(%arg0: i32) -> (i32, i32) {
    %c0_i32 = arith.constant 0 : i32
    %c0_i32_0 = arith.constant 0 : i32
    return %arg0, %c0_i32 : i32, i32
  }
  func.func @transform_1(%arg0: i32) -> (i32, i32) {
    %c0_i32 = arith.constant 0 : i32
    %c0_i32_0 = arith.constant 0 : i32
    %c0_i32_1 = arith.constant 0 : i32
    return %c0_i32, %c0_i32_0 : i32, i32
  }
  func.func @transform_2(%arg0: i32) -> (i32, i32) {
    %c0_i32 = arith.constant 0 : i32
    %c0_i32_0 = arith.constant 0 : i32
    %c0_i32_1 = arith.constant 0 : i32
    return %c0_i32, %c0_i32_0 : i32, i32
  }
  func.func @transform_3(%arg0: i32) -> (i32, i32) {
    %c0_i32 = arith.constant 0 : i32
    %c0_i32_0 = arith.constant 0 : i32
    %c0_i32_1 = arith.constant 0 : i32
    return %c0_i32, %c0_i32_0 : i32, i32
  }
  func.func @transform_4(%arg0: i32) -> (i32, i32) {
    %c0_i32 = arith.constant 0 : i32
    %c0_i32_0 = arith.constant 0 : i32
    %c0_i32_1 = arith.constant 0 : i32
    return %c0_i32, %c0_i32_0 : i32, i32
  }
  func.func @transform_5(%arg0: i32) -> (i32, i32) {
    %c0_i32 = arith.constant 0 : i32
    %c0_i32_0 = arith.constant 0 : i32
    %c0_i32_1 = arith.constant 0 : i32
    return %c0_i32, %c0_i32_0 : i32, i32
  }
  func.func @transform_6(%arg0: i32) -> (i32, i32) {
    %c0_i32 = arith.constant 0 : i32
    %c0_i32_0 = arith.constant 0 : i32
    %c0_i32_1 = arith.constant 0 : i32
    return %c0_i32, %c0_i32_0 : i32, i32
  }
  func.func @transform_7(%arg0: i32) -> (i32, i32) {
    %c0_i32 = arith.constant 0 : i32
    %c0_i32_0 = arith.constant 0 : i32
    return %arg0, %c0_i32 : i32, i32
  }
}

module attributes {stable_mosaic.version = 11 : i64} {
  func.func @_mlp_kernel(%arg0: i32, %arg1: memref<8x32xf32, #tpu.memory_space<vmem>>, %arg2: memref<32x64xf32, #tpu.memory_space<vmem>>, %arg3: memref<1x64xf32, #tpu.memory_space<vmem>>, %arg4: memref<64x32xf32, #tpu.memory_space<vmem>>, %arg5: memref<1x32xf32, #tpu.memory_space<vmem>>, %arg6: memref<32x128xf32, #tpu.memory_space<vmem>>, %arg7: memref<1x128xf32, #tpu.memory_space<vmem>>, %arg8: memref<8x128xf32, #tpu.memory_space<vmem>>) attributes {dimension_semantics = [#tpu.dimension_semantics<parallel>], iteration_bounds = array<i64: 1>, scalar_prefetch = 0 : i64, scratch_operands = 0 : i64, tpu.core_type = #tpu.core_type<tc>, window_params = [{transform_indices = @transform_0, window_bounds = array<i64: 8, 32>}, {pipeline_mode = #tpu.pipeline_mode<synchronous>, transform_indices = @transform_1, window_bounds = array<i64: 32, 64>}, {pipeline_mode = #tpu.pipeline_mode<synchronous>, transform_indices = @transform_2, window_bounds = array<i64: 1, 64>}, {pipeline_mode = #tpu.pipeline_mode<synchronous>, transform_indices = @transform_3, window_bounds = array<i64: 64, 32>}, {pipeline_mode = #tpu.pipeline_mode<synchronous>, transform_indices = @transform_4, window_bounds = array<i64: 1, 32>}, {pipeline_mode = #tpu.pipeline_mode<synchronous>, transform_indices = @transform_5, window_bounds = array<i64: 32, 128>}, {pipeline_mode = #tpu.pipeline_mode<synchronous>, transform_indices = @transform_6, window_bounds = array<i64: 1, 128>}, {transform_indices = @transform_7, window_bounds = array<i64: 8, 128>}]} {
    %c0 = arith.constant 0 : index
    %c0_0 = arith.constant 0 : index
    %0 = vector.load %arg1[%c0, %c0_0] : memref<8x32xf32, #tpu.memory_space<vmem>>, vector<8x32xf32>
    %c0_1 = arith.constant 0 : index
    %c0_2 = arith.constant 0 : index
    %1 = vector.load %arg2[%c0_1, %c0_2] : memref<32x64xf32, #tpu.memory_space<vmem>>, vector<32x64xf32>
    %c0_3 = arith.constant 0 : index
    %c0_4 = arith.constant 0 : index
    %2 = vector.load %arg3[%c0_3, %c0_4] : memref<1x64xf32, #tpu.memory_space<vmem>>, vector<1x64xf32>
    %cst = arith.constant dense<0.000000e+00> : vector<8x64xf32>
    %3 = tpu.matmul %0, %1, %cst {dimension_numbers = #tpu.dot_dimension_numbers<[1], [0], [0], [1], [0, 0, 1, 1], [], []>} : vector<8x32xf32>, vector<32x64xf32>, vector<8x64xf32> -> vector<8x64xf32>
    %4 = vector.broadcast %2 : vector<1x64xf32> to vector<8x64xf32>
    %5 = arith.addf %3, %4 : vector<8x64xf32>
    %cst_5 = arith.constant 0.000000e+00 : f32
    %6 = vector.broadcast %cst_5 : f32 to vector<8x64xf32>
    %7 = arith.maximumf %5, %6 : vector<8x64xf32>
    %c0_6 = arith.constant 0 : index
    %c0_7 = arith.constant 0 : index
    %8 = vector.load %arg4[%c0_6, %c0_7] : memref<64x32xf32, #tpu.memory_space<vmem>>, vector<64x32xf32>
    %c0_8 = arith.constant 0 : index
    %c0_9 = arith.constant 0 : index
    %9 = vector.load %arg5[%c0_8, %c0_9] : memref<1x32xf32, #tpu.memory_space<vmem>>, vector<1x32xf32>
    %cst_10 = arith.constant dense<0.000000e+00> : vector<8x32xf32>
    %10 = tpu.matmul %7, %8, %cst_10 {dimension_numbers = #tpu.dot_dimension_numbers<[1], [0], [0], [1], [0, 0, 1, 1], [], []>} : vector<8x64xf32>, vector<64x32xf32>, vector<8x32xf32> -> vector<8x32xf32>
    %11 = vector.broadcast %9 : vector<1x32xf32> to vector<8x32xf32>
    %12 = arith.addf %10, %11 : vector<8x32xf32>
    %cst_11 = arith.constant 0.000000e+00 : f32
    %13 = vector.broadcast %cst_11 : f32 to vector<8x32xf32>
    %14 = arith.maximumf %12, %13 : vector<8x32xf32>
    %c0_12 = arith.constant 0 : index
    %c0_13 = arith.constant 0 : index
    %15 = vector.load %arg6[%c0_12, %c0_13] : memref<32x128xf32, #tpu.memory_space<vmem>>, vector<32x128xf32>
    %c0_14 = arith.constant 0 : index
    %c0_15 = arith.constant 0 : index
    %16 = vector.load %arg7[%c0_14, %c0_15] : memref<1x128xf32, #tpu.memory_space<vmem>>, vector<1x128xf32>
    %cst_16 = arith.constant dense<0.000000e+00> : vector<8x128xf32>
    %17 = tpu.matmul %14, %15, %cst_16 {dimension_numbers = #tpu.dot_dimension_numbers<[1], [0], [0], [1], [0, 0, 1, 1], [], []>} : vector<8x32xf32>, vector<32x128xf32>, vector<8x128xf32> -> vector<8x128xf32>
    %18 = vector.broadcast %16 : vector<1x128xf32> to vector<8x128xf32>
    %19 = arith.addf %17, %18 : vector<8x128xf32>
    %c0_17 = arith.constant 0 : index
    %c0_18 = arith.constant 0 : index
    %20 = vector.load %arg8[%c0_17, %c0_18] : memref<8x128xf32, #tpu.memory_space<vmem>>, vector<8x128xf32>
    tpu.vector_store %arg8[%c0_17, %c0_18], %19 {strides = array<i32>} : memref<8x128xf32, #tpu.memory_space<vmem>>, vector<8x128xf32>,
    return
  }
  func.func @transform_0(%arg0: i32) -> (i32, i32) {
    %c0_i32 = arith.constant 0 : i32
    %c0_i32_0 = arith.constant 0 : i32
    return %arg0, %c0_i32 : i32, i32
  }
  func.func @transform_1(%arg0: i32) -> (i32, i32) {
    %c0_i32 = arith.constant 0 : i32
    %c0_i32_0 = arith.constant 0 : i32
    %c0_i32_1 = arith.constant 0 : i32
    return %c0_i32, %c0_i32_0 : i32, i32
  }
  func.func @transform_2(%arg0: i32) -> (i32, i32) {
    %c0_i32 = arith.constant 0 : i32
    %c0_i32_0 = arith.constant 0 : i32
    %c0_i32_1 = arith.constant 0 : i32
    return %c0_i32, %c0_i32_0 : i32, i32
  }
  func.func @transform_3(%arg0: i32) -> (i32, i32) {
    %c0_i32 = arith.constant 0 : i32
    %c0_i32_0 = arith.constant 0 : i32
    %c0_i32_1 = arith.constant 0 : i32
    return %c0_i32, %c0_i32_0 : i32, i32
  }
  func.func @transform_4(%arg0: i32) -> (i32, i32) {
    %c0_i32 = arith.constant 0 : i32
    %c0_i32_0 = arith.constant 0 : i32
    %c0_i32_1 = arith.constant 0 : i32
    return %c0_i32, %c0_i32_0 : i32, i32
  }
  func.func @transform_5(%arg0: i32) -> (i32, i32) {
    %c0_i32 = arith.constant 0 : i32
    %c0_i32_0 = arith.constant 0 : i32
    %c0_i32_1 = arith.constant 0 : i32
    return %c0_i32, %c0_i32_0 : i32, i32
  }
  func.func @transform_6(%arg0: i32) -> (i32, i32) {
    %c0_i32 = arith.constant 0 : i32
    %c0_i32_0 = arith.constant 0 : i32
    %c0_i32_1 = arith.constant 0 : i32
    return %c0_i32, %c0_i32_0 : i32, i32
  }
  func.func @transform_7(%arg0: i32) -> (i32, i32) {
    %c0_i32 = arith.constant 0 : i32
    %c0_i32_0 = arith.constant 0 : i32
    return %arg0, %c0_i32 : i32, i32
  }
}

</mosaic_0001>

<llo_original>
// kernel: tpu_custom_call.1
$region0: #{tpu_custom_call.1}
  #allocation0 [shape = 'u32[]', space=smem, size = 0x4, offset = 0x4, fixed_abs, tag = 'smem constant byte address 0x4 - core index']
  #allocation1 [shape = 'u32[72,128]{1,0:T(1,128)}', space=vmem, size = 0x9000, scoped, tag = 'internal scratch']
  %s0 = inlined_call_operand.vmem [shape: f32[8,32], index: 0, kind: input, shape index: {}]
  %s1 = inlined_call_operand.vmem [shape: f32[32,64], index: 1, kind: input, shape index: {}]
  %s2 = inlined_call_operand.vmem [shape: f32[1,64], index: 2, kind: input, shape index: {}]
  %s3 = inlined_call_operand.vmem [shape: f32[64,32], index: 3, kind: input, shape index: {}]
  %s4 = inlined_call_operand.vmem [shape: f32[1,32], index: 4, kind: input, shape index: {}]
  %s5 = inlined_call_operand.vmem [shape: f32[32,128], index: 5, kind: input, shape index: {}]
  %s6 = inlined_call_operand.vmem [shape: f32[1,128], index: 6, kind: input, shape index: {}]
  %s7 = inlined_call_operand.hbm [shape: f32[8,128], index: 7, kind: output, shape index: {}]
  %s8 = sld [smem:[#allocation0]]
  $region38: #{tpu_custom_call.1} parent=0
    _
  %s10 = ssub.s32 1, %s8
  %s11 = scalar_select 0, %s10, %s8
  $region1: #{tpu_custom_call.1} parent=0
    #allocation2 [shape = 'u8[4096]{0}', space=vmem, size = 0x1000, scoped, tag = 'output window, operand 0, single buffered']
    #allocation3 [shape = 's32[1]{0}', space=sflag, size = 0x4, scoped, tag = 'scoped memory for tpu_custom_call.1']
    %12 = vsyncpa [#allocation3], 0
    // Predicated region
    $region2: #{tpu_custom_call.1} parent=1 // pred_check
      _
    $region3: #{tpu_custom_call.1} parent=1 // pred_check_branch
      %14 = sbr.rel (0) target = $region5
    $region4: #{tpu_custom_call.1} parent=1 // pred_region
      _
    $region5: #{tpu_custom_call.1} parent=1 // pred_fallthru
      _
    // Predicated region
    $region6: #{tpu_custom_call.1} parent=1 // pred_check
      _
    $region7: #{tpu_custom_call.1} parent=1 // pred_check_branch
      %16 = sbr.rel (0) target = $region9
    $region8: #{tpu_custom_call.1} parent=1 // pred_region
      _
    $region9: #{tpu_custom_call.1} parent=1 // pred_fallthru
      _
    // Predicated region
    $region10: #{tpu_custom_call.1} parent=1 // pred_check
      _
    $region11: #{tpu_custom_call.1} parent=1 // pred_check_branch
      %18 = sbr.rel (0) target = $region13
    $region12: #{tpu_custom_call.1} parent=1 // pred_region
      _
    $region13: #{tpu_custom_call.1} parent=1 // pred_fallthru
      _
    // Predicated region
    $region14: #{tpu_custom_call.1} parent=1 // pred_check
      _
    $region15: #{tpu_custom_call.1} parent=1 // pred_check_branch
      %20 = sbr.rel (0) target = $region17
    $region16: #{tpu_custom_call.1} parent=1 // pred_region
      _
    $region17: #{tpu_custom_call.1} parent=1 // pred_fallthru
      _
    // Predicated region
    $region18: #{tpu_custom_call.1} parent=1 // pred_check
      _
    $region19: #{tpu_custom_call.1} parent=1 // pred_check_branch
      %22 = sbr.rel (0) target = $region21
    $region20: #{tpu_custom_call.1} parent=1 // pred_region
      _
    $region21: #{tpu_custom_call.1} parent=1 // pred_fallthru
      _
    // Predicated region
    $region22: #{tpu_custom_call.1} parent=1 // pred_check
      _
    $region23: #{tpu_custom_call.1} parent=1 // pred_check_branch
      %24 = sbr.rel (0) target = $region25
    $region24: #{tpu_custom_call.1} parent=1 // pred_region
      _
    $region25: #{tpu_custom_call.1} parent=1 // pred_fallthru
      _
    // Predicated region
    $region26: #{tpu_custom_call.1} parent=1 // pred_check
      _
    $region27: #{tpu_custom_call.1} parent=1 // pred_check_branch
      %26 = sbr.rel (0) target = $region29
    $region28: #{tpu_custom_call.1} parent=1 // pred_region
      _
    $region29: #{tpu_custom_call.1} parent=1 // pred_fallthru
      _
    %v27 = vld [vmem:[%s0] sm:$0xff]
    %v28 = vld [vmem:[%s1] sm:$0xff]
    %v29 = vld [vmem:[%s1 + $0x8] sm:$0xff]
    %v30 = vld [vmem:[%s1 + $0x10] sm:$0xff]
    %v31 = vld [vmem:[%s1 + $0x18] sm:$0xff]
    %v32 = vld [vmem:[%s2] sm:$0x1]
    %v34 = vperm.slane %v32, 0
    %vm36 = vcmask 261120
    %v38 = vsel %vm36, %v27, 0
    %40 = vmatpush.msra.mxu0 0.0
    %41 = vmatpush.msra.mxu0 0.0
    %42 = vmatpush.msra.mxu0 0.0
    %43 = vmatpush.msra.mxu0 0.0
    %44 = vmatpush.msra.mxu0 0.0
    %45 = vmatpush.msra.mxu0 0.0
    %46 = vmatpush.msra.mxu0 0.0
    %47 = vmatpush.msra.mxu0 0.0
    %48 = vmatpush.msra.mxu0 0.0
    %49 = vmatpush.msra.mxu0 0.0
    %50 = vmatpush.msra.mxu0 0.0
    %51 = vmatpush.msra.mxu0 0.0
    %52 = vmatpush.msra.mxu0 %v31
    %53 = vmatpush.msra.mxu0 %v30
    %54 = vmatpush.msra.mxu0 %v29
    %55 = vmatpush.msra.mxu0 %v28
    %56 = vmatmul.f32.gmra.mxu0 %v38
    %v57 = vpop.f32.mrf.mxu0
    %v58 = vadd.f32 %v34, %v57
    %59 = vdwg.mxu0
    %v60 = vmax.f32 %v58, 0.0
    %v61 = vld [vmem:[%s3] sm:$0xff]
    %v62 = vld [vmem:[%s3 + $0x8] sm:$0xff]
    %v63 = vld [vmem:[%s3 + $0x10] sm:$0xff]
    %v64 = vld [vmem:[%s3 + $0x18] sm:$0xff]
    %v65 = vld [vmem:[%s3 + $0x20] sm:$0xff]
    %v66 = vld [vmem:[%s3 + $0x28] sm:$0xff]
    %v67 = vld [vmem:[%s3 + $0x30] sm:$0xff]
    %v68 = vld [vmem:[%s3 + $0x38] sm:$0xff]
    %v69 = vld [vmem:[%s4] sm:$0x1]
    %v71 = vperm.slane %v69, 0
    %vm73 = vcmask 523264
    %v75 = vsel %vm73, %v60, 0
    %77 = vmatpush.msra.mxu0 0.0
    %78 = vmatpush.msra.mxu0 0.0
    %79 = vmatpush.msra.mxu0 0.0
    %80 = vmatpush.msra.mxu0 0.0
    %81 = vmatpush.msra.mxu0 0.0
    %82 = vmatpush.msra.mxu0 0.0
    %83 = vmatpush.msra.mxu0 0.0
    %84 = vmatpush.msra.mxu0 0.0
    %85 = vmatpush.msra.mxu0 %v68
    %86 = vmatpush.msra.mxu0 %v67
    %87 = vmatpush.msra.mxu0 %v66
    %88 = vmatpush.msra.mxu0 %v65
    %89 = vmatpush.msra.mxu0 %v64
    %90 = vmatpush.msra.mxu0 %v63
    %91 = vmatpush.msra.mxu0 %v62
    %92 = vmatpush.msra.mxu0 %v61
    %93 = vmatmul.f32.gmra.mxu0 %v75
    %v94 = vpop.f32.mrf.mxu0
    %v95 = vadd.f32 %v71, %v94
    %96 = vdwg.mxu0
    %v97 = vmax.f32 %v95, 0.0
    %v98 = vld [vmem:[%s5] sm:$0xff]
    %v99 = vld [vmem:[%s5 + $0x8] sm:$0xff]
    %v100 = vld [vmem:[%s5 + $0x10] sm:$0xff]
    %v101 = vld [vmem:[%s5 + $0x18] sm:$0xff]
    %v102 = vld [vmem:[%s6] sm:$0x1]
    %v104 = vperm.slane %v102, 0
    %v107 = vsel %vm36, %v97, 0
    %109 = vmatpush.msra.mxu0 0.0
    %110 = vmatpush.msra.mxu0 0.0
    %111 = vmatpush.msra.mxu0 0.0
    %112 = vmatpush.msra.mxu0 0.0
    %113 = vmatpush.msra.mxu0 0.0
    %114 = vmatpush.msra.mxu0 0.0
    %115 = vmatpush.msra.mxu0 0.0
    %116 = vmatpush.msra.mxu0 0.0
    %117 = vmatpush.msra.mxu0 0.0
    %118 = vmatpush.msra.mxu0 0.0
    %119 = vmatpush.msra.mxu0 0.0
    %120 = vmatpush.msra.mxu0 0.0
    %121 = vmatpush.msra.mxu0 %v101
    %122 = vmatpush.msra.mxu0 %v100
    %123 = vmatpush.msra.mxu0 %v99
    %124 = vmatpush.msra.mxu0 %v98
    %125 = vmatmul.f32.gmra.mxu0 %v107
    %v126 = vpop.f32.mrf.mxu0
    %v127 = vadd.f32 %v104, %v126
    %128 = vdwg.mxu0
    %129 = vst [vmem:[#allocation2] sm:$0xff] %v127
    // Predicated region
    $region30: #{tpu_custom_call.1} parent=1 // pred_check
      _
    $region31: #{tpu_custom_call.1} parent=1 // pred_check_branch
      %131 = sbr.rel (0) target = $region33
    $region32: #{tpu_custom_call.1} parent=1 // pred_region
      %133 = vsyncadd [#allocation3], 0
      %s135 = sshll.u32 [#allocation2], 4
      %s136 = int_to_ptr.vmem [resolvable:$true] %s135
      %s137 = sshll.u32 %s7, 4
      %s138 = int_to_ptr.hbm [resolvable:$true] %s137
      %140 = dma.vmem_to_hbm [thread:$0]  %s136, 128, %s138, [#allocation3]
    $region33: #{tpu_custom_call.1} parent=1 // pred_fallthru
      _
    // Predicated region
    $region34: #{tpu_custom_call.1} parent=1 // pred_check
      _
    $region35: #{tpu_custom_call.1} parent=1 // pred_check_branch
      %142 = sbr.rel (0) target = $region37
    $region36: #{tpu_custom_call.1} parent=1 // pred_region
      %144 = dma.done [#allocation3], 128
    $region37: #{tpu_custom_call.1} parent=1 // pred_fallthru
      _
    %145 = vsyncpa [#allocation3], 1

// kernel: tpu_custom_call.1
$region0: #{tpu_custom_call.1}
  #allocation0 [shape = 'u32[]', space=smem, size = 0x4, offset = 0x4, fixed_abs, tag = 'smem constant byte address 0x4 - core index']
  #allocation1 [shape = 'u32[72,128]{1,0:T(1,128)}', space=vmem, size = 0x9000, scoped, tag = 'internal scratch']
  %s0 = inlined_call_operand.vmem [shape: f32[8,32], index: 0, kind: input, shape index: {}]
  %s1 = inlined_call_operand.vmem [shape: f32[32,64], index: 1, kind: input, shape index: {}]
  %s2 = inlined_call_operand.vmem [shape: f32[1,64], index: 2, kind: input, shape index: {}]
  %s3 = inlined_call_operand.vmem [shape: f32[64,32], index: 3, kind: input, shape index: {}]
  %s4 = inlined_call_operand.vmem [shape: f32[1,32], index: 4, kind: input, shape index: {}]
  %s5 = inlined_call_operand.vmem [shape: f32[32,128], index: 5, kind: input, shape index: {}]
  %s6 = inlined_call_operand.vmem [shape: f32[1,128], index: 6, kind: input, shape index: {}]
  %s7 = inlined_call_operand.hbm [shape: f32[8,128], index: 7, kind: output, shape index: {}]
  %s8 = sld [smem:[#allocation0]]
  $region38: #{tpu_custom_call.1} parent=0
    _
  %s10 = ssub.s32 1, %s8
  %s11 = scalar_select 0, %s10, %s8
  $region1: #{tpu_custom_call.1} parent=0
    #allocation2 [shape = 'u8[4096]{0}', space=vmem, size = 0x1000, scoped, tag = 'output window, operand 0, single buffered']
    #allocation3 [shape = 's32[1]{0}', space=sflag, size = 0x4, scoped, tag = 'scoped memory for tpu_custom_call.1']
    %12 = vsyncpa [#allocation3], 0
    // Predicated region
    $region2: #{tpu_custom_call.1} parent=1 // pred_check
      _
    $region3: #{tpu_custom_call.1} parent=1 // pred_check_branch
      %14 = sbr.rel (0) target = $region5
    $region4: #{tpu_custom_call.1} parent=1 // pred_region
      _
    $region5: #{tpu_custom_call.1} parent=1 // pred_fallthru
      _
    // Predicated region
    $region6: #{tpu_custom_call.1} parent=1 // pred_check
      _
    $region7: #{tpu_custom_call.1} parent=1 // pred_check_branch
      %16 = sbr.rel (0) target = $region9
    $region8: #{tpu_custom_call.1} parent=1 // pred_region
      _
    $region9: #{tpu_custom_call.1} parent=1 // pred_fallthru
      _
    // Predicated region
    $region10: #{tpu_custom_call.1} parent=1 // pred_check
      _
    $region11: #{tpu_custom_call.1} parent=1 // pred_check_branch
      %18 = sbr.rel (0) target = $region13
    $region12: #{tpu_custom_call.1} parent=1 // pred_region
      _
    $region13: #{tpu_custom_call.1} parent=1 // pred_fallthru
      _
    // Predicated region
    $region14: #{tpu_custom_call.1} parent=1 // pred_check
      _
    $region15: #{tpu_custom_call.1} parent=1 // pred_check_branch
      %20 = sbr.rel (0) target = $region17
    $region16: #{tpu_custom_call.1} parent=1 // pred_region
      _
    $region17: #{tpu_custom_call.1} parent=1 // pred_fallthru
      _
    // Predicated region
    $region18: #{tpu_custom_call.1} parent=1 // pred_check
      _
    $region19: #{tpu_custom_call.1} parent=1 // pred_check_branch
      %22 = sbr.rel (0) target = $region21
    $region20: #{tpu_custom_call.1} parent=1 // pred_region
      _
    $region21: #{tpu_custom_call.1} parent=1 // pred_fallthru
      _
    // Predicated region
    $region22: #{tpu_custom_call.1} parent=1 // pred_check
      _
    $region23: #{tpu_custom_call.1} parent=1 // pred_check_branch
      %24 = sbr.rel (0) target = $region25
    $region24: #{tpu_custom_call.1} parent=1 // pred_region
      _
    $region25: #{tpu_custom_call.1} parent=1 // pred_fallthru
      _
    // Predicated region
    $region26: #{tpu_custom_call.1} parent=1 // pred_check
      _
    $region27: #{tpu_custom_call.1} parent=1 // pred_check_branch
      %26 = sbr.rel (0) target = $region29
    $region28: #{tpu_custom_call.1} parent=1 // pred_region
      _
    $region29: #{tpu_custom_call.1} parent=1 // pred_fallthru
      _
    %v27 = vld [vmem:[%s0] sm:$0xff]
    %v28 = vld [vmem:[%s1] sm:$0xff]
    %v29 = vld [vmem:[%s1 + $0x8] sm:$0xff]
    %v30 = vld [vmem:[%s1 + $0x10] sm:$0xff]
    %v31 = vld [vmem:[%s1 + $0x18] sm:$0xff]
    %v32 = vld [vmem:[%s2] sm:$0x1]
    %v34 = vperm.slane %v32, 0
    %vm36 = vcmask 261120
    %v38 = vsel %vm36, %v27, 0
    %40 = vmatpush.msra.mxu0 0.0
    %41 = vmatpush.msra.mxu0 0.0
    %42 = vmatpush.msra.mxu0 0.0
    %43 = vmatpush.msra.mxu0 0.0
    %44 = vmatpush.msra.mxu0 0.0
    %45 = vmatpush.msra.mxu0 0.0
    %46 = vmatpush.msra.mxu0 0.0
    %47 = vmatpush.msra.mxu0 0.0
    %48 = vmatpush.msra.mxu0 0.0
    %49 = vmatpush.msra.mxu0 0.0
    %50 = vmatpush.msra.mxu0 0.0
    %51 = vmatpush.msra.mxu0 0.0
    %52 = vmatpush.msra.mxu0 %v31
    %53 = vmatpush.msra.mxu0 %v30
    %54 = vmatpush.msra.mxu0 %v29
    %55 = vmatpush.msra.mxu0 %v28
    %56 = vmatmul.f32.gmra.mxu0 %v38
    %v57 = vpop.f32.mrf.mxu0
    %v58 = vadd.f32 %v34, %v57
    %59 = vdwg.mxu0
    %v60 = vmax.f32 %v58, 0.0
    %v61 = vld [vmem:[%s3] sm:$0xff]
    %v62 = vld [vmem:[%s3 + $0x8] sm:$0xff]
    %v63 = vld [vmem:[%s3 + $0x10] sm:$0xff]
    %v64 = vld [vmem:[%s3 + $0x18] sm:$0xff]
    %v65 = vld [vmem:[%s3 + $0x20] sm:$0xff]
    %v66 = vld [vmem:[%s3 + $0x28] sm:$0xff]
    %v67 = vld [vmem:[%s3 + $0x30] sm:$0xff]
    %v68 = vld [vmem:[%s3 + $0x38] sm:$0xff]
    %v69 = vld [vmem:[%s4] sm:$0x1]
    %v71 = vperm.slane %v69, 0
    %vm73 = vcmask 523264
    %v75 = vsel %vm73, %v60, 0
    %77 = vmatpush.msra.mxu0 0.0
    %78 = vmatpush.msra.mxu0 0.0
    %79 = vmatpush.msra.mxu0 0.0
    %80 = vmatpush.msra.mxu0 0.0
    %81 = vmatpush.msra.mxu0 0.0
    %82 = vmatpush.msra.mxu0 0.0
    %83 = vmatpush.msra.mxu0 0.0
    %84 = vmatpush.msra.mxu0 0.0
    %85 = vmatpush.msra.mxu0 %v68
    %86 = vmatpush.msra.mxu0 %v67
    %87 = vmatpush.msra.mxu0 %v66
    %88 = vmatpush.msra.mxu0 %v65
    %89 = vmatpush.msra.mxu0 %v64
    %90 = vmatpush.msra.mxu0 %v63
    %91 = vmatpush.msra.mxu0 %v62
    %92 = vmatpush.msra.mxu0 %v61
    %93 = vmatmul.f32.gmra.mxu0 %v75
    %v94 = vpop.f32.mrf.mxu0
    %v95 = vadd.f32 %v71, %v94
    %96 = vdwg.mxu0
    %v97 = vmax.f32 %v95, 0.0
    %v98 = vld [vmem:[%s5] sm:$0xff]
    %v99 = vld [vmem:[%s5 + $0x8] sm:$0xff]
    %v100 = vld [vmem:[%s5 + $0x10] sm:$0xff]
    %v101 = vld [vmem:[%s5 + $0x18] sm:$0xff]
    %v102 = vld [vmem:[%s6] sm:$0x1]
    %v104 = vperm.slane %v102, 0
    %v107 = vsel %vm36, %v97, 0
    %109 = vmatpush.msra.mxu0 0.0
    %110 = vmatpush.msra.mxu0 0.0
    %111 = vmatpush.msra.mxu0 0.0
    %112 = vmatpush.msra.mxu0 0.0
    %113 = vmatpush.msra.mxu0 0.0
    %114 = vmatpush.msra.mxu0 0.0
    %115 = vmatpush.msra.mxu0 0.0
    %116 = vmatpush.msra.mxu0 0.0
    %117 = vmatpush.msra.mxu0 0.0
    %118 = vmatpush.msra.mxu0 0.0
    %119 = vmatpush.msra.mxu0 0.0
    %120 = vmatpush.msra.mxu0 0.0
    %121 = vmatpush.msra.mxu0 %v101
    %122 = vmatpush.msra.mxu0 %v100
    %123 = vmatpush.msra.mxu0 %v99
    %124 = vmatpush.msra.mxu0 %v98
    %125 = vmatmul.f32.gmra.mxu0 %v107
    %v126 = vpop.f32.mrf.mxu0
    %v127 = vadd.f32 %v104, %v126
    %128 = vdwg.mxu0
    %129 = vst [vmem:[#allocation2] sm:$0xff] %v127
    // Predicated region
    $region30: #{tpu_custom_call.1} parent=1 // pred_check
      _
    $region31: #{tpu_custom_call.1} parent=1 // pred_check_branch
      %131 = sbr.rel (0) target = $region33
    $region32: #{tpu_custom_call.1} parent=1 // pred_region
      %133 = vsyncadd [#allocation3], 0
      %s135 = sshll.u32 [#allocation2], 4
      %s136 = int_to_ptr.vmem [resolvable:$true] %s135
      %s137 = sshll.u32 %s7, 4
      %s138 = int_to_ptr.hbm [resolvable:$true] %s137
      %140 = dma.vmem_to_hbm [thread:$0]  %s136, 128, %s138, [#allocation3]
    $region33: #{tpu_custom_call.1} parent=1 // pred_fallthru
      _
    // Predicated region
    $region34: #{tpu_custom_call.1} parent=1 // pred_check
      _
    $region35: #{tpu_custom_call.1} parent=1 // pred_check_branch
      %142 = sbr.rel (0) target = $region37
    $region36: #{tpu_custom_call.1} parent=1 // pred_region
      %144 = dma.done [#allocation3], 128
    $region37: #{tpu_custom_call.1} parent=1 // pred_fallthru
      _
    %145 = vsyncpa [#allocation3], 1

</llo_original>
